<compile_context>
chip_gen: v7x
topology: tpu7x:2x2x1
jax: 0.10.0
libtpu: 0.0.40
codegen_flags: <defaults>
</compile_context>

<pallas_src>
import functools

import jax
import jax.numpy as jnp
import numpy as np
from jax.experimental import pallas as pl
from jax.experimental.pallas import tpu as pltpu


# ----------------------------- kernel ---------------------------------------


def _avg_pool_kernel(x_ref, o_ref, *, kernel_size, lc):
    """x_ref: (bt, l_blk, ht) VMEM tile with l_blk >= lc*kernel_size.
    o_ref: (bt, lc, ht), or (bt, ht) when l_out == 1 (fast path)."""
    bt, _, ht = x_ref.shape
    k = kernel_size
    lw = lc * k  # sequence elements actually pooled in this block

    if lc == 1 or k % 8 == 0:
        # Window split aligns with the (8,128) sublane tiling (or is trivial):
        # one bulk load, one reshape, one cross-sublane reduce.
        x = x_ref[:, 0:lw, :].astype(jnp.float32)  # static slice; drops tail only in
                                                   # the rare full-L fallback
        pooled = jnp.sum(x.reshape(bt, lc, k, ht), axis=2)          # (bt, lc, ht)
    else:
        # Window not sublane-aligned: accumulate k sublane-strided loads, each picking
        # one element of every window.  Unroll is over k (small), VPU adds, no
        # relayout and no l_out-sized unroll.
        pooled = x_ref[:, pl.ds(0, lc, stride=k), :].astype(jnp.float32)
        for j in range(1, k):
            pooled = pooled + x_ref[:, pl.ds(j, lc, stride=k), :].astype(jnp.float32)

    pooled = pooled * (1.0 / float(k))
    if o_ref.ndim == 2:                      # l_out == 1 fast path -> (bt, ht)
        o_ref[...] = pooled[:, 0, :].astype(o_ref.dtype)
    else:
        o_ref[...] = pooled.astype(o_ref.dtype)


# --------------------------- tiling helpers ---------------------------------


def _vmem_capacity_bytes():
    try:
        cap = getattr(pltpu.get_tpu_info(), "vmem_capacity_bytes", None)
        if cap:
            return int(cap)
    except Exception:
        pass
    return 64 << 20  # conservative default (v7x per-TensorCore VMEM)


def _divisors_desc(n):
    return [d for d in range(n, 0, -1) if n % d == 0]


def _block_bytes(bt, lw, lc, ht, itemsize):
    """Per-grid-step VMEM estimate: double-buffered in/out HBM blocks + f32 work."""
    in_blk = bt * lw * ht * itemsize
    out_blk = bt * lc * ht * itemsize
    f32_work = bt * (lw + lc) * ht * 4
    return 2 * in_blk + 2 * out_blk + f32_work


def _lc_options(l_out, k, L):
    """Valid (windows_per_block, input_block_L_extent) choices, ascending.

    Constraints: lc | l_out; the output block's 2nd-to-last dim (lc) must be a
    multiple of 8 or == l_out; the input block's 2nd-to-last dim (lw) must be a
    multiple of 8 or == L (full extent)."""
    opts = []
    for d in range(1, l_out + 1):
        if l_out % d:
            continue
        if d % 8 != 0 and d != l_out:
            continue
        lw = d * k
        if lw % 8 == 0 or lw == L:
            opts.append((d, lw))
        elif d == l_out:
            # Un-alignable window block: fall back to a full-L input block; the
            # dropped tail is sliced off in-kernel (only case where it is DMA'd).
            opts.append((d, L))
    return opts


def _pick_tiles(B, L, H, k, l_out, itemsize, cap):
    """Choose (bt, lc, lw, ht, out_2d).  Priorities: full-H contiguous DMA rows,
    window-aligned L chunks, then batch packing; never leave a 1-step grid when it
    can be split (v7x dual TensorCore)."""
    budget = int(cap * 0.55)  # per-step working set incl. double buffering
    lc_opts = _lc_options(l_out, k, L)
    min_lc, min_lw = lc_opts[0]

    # H tile: keep full H unless even the minimal block cannot fit.
    ht = H
    if _block_bytes(1, min_lw, min_lc, H, itemsize) > budget and H % 128 == 0:
        for cand in _divisors_desc(H):
            if cand % 128 == 0 and _block_bytes(1, min_lw, min_lc, cand, itemsize) <= budget:
                ht = cand
                break
        else:
            ht = 128

    # L chunk: largest window-aligned chunk that fits at bt=1.
    lc, lw = min_lc, min_lw
    for d, w in lc_opts:
        if _block_bytes(1, w, d, ht, itemsize) <= budget:
            lc, lw = d, w

    # Batch tile: largest divisor of B that fits; the 2-D fast-path output block
    # (bt, ht) needs bt == B or bt % 8 == 0 (sublane rule).
    out_2d = l_out == 1
    bt = None
    for d in _divisors_desc(B):
        if _block_bytes(d, lw, lc, ht, itemsize) > budget:
            continue
        if out_2d and d != B and d % 8 != 0:
            continue
        bt = d
        break
    if bt is None:
        if out_2d:
            out_2d = False  # fall back to a (B, 1, H) output (no sublane rule on bt)
        bt = 1
        for d in _divisors_desc(B):
            if _block_bytes(d, lw, lc, ht, itemsize) <= budget:
                bt = d
                break

    # Never leave the grid at a single step if it can be split (v7x: 2 TensorCores).
    if (B // bt) * (l_out // lc) * (H // ht) == 1:
        for d in _divisors_desc(B):
            if d < B and ((not out_2d) or d % 8 == 0):
                bt = d
                break
        else:
            smaller = [(d, w) for d, w in lc_opts if d < lc]
            if smaller:
                lc, lw = smaller[-1]
            elif H % 256 == 0:
                ht = H // 2

    return bt, lc, lw, ht, out_2d


# ----------------------------- wrappers -------------------------------------


def _avg_pool_pallas(x, kernel_size, l_out):
    B, L, H = x.shape
    itemsize = jnp.dtype(x.dtype).itemsize
    l_used = l_out * kernel_size
    cap = _vmem_capacity_bytes()
    bt, lc, lw, ht, out_2d = _pick_tiles(B, L, H, kernel_size, l_out, itemsize, cap)

    # Generation-aware VMEM limit: 3/4 of physical (96 MiB on v5e/v6e, 48 MiB on v7x),
    # but no more than this kernel actually needs (+slack).
    per_step = _block_bytes(bt, lw, lc, ht, itemsize)
    vmem_limit = int(min(cap * 3 // 4, max(32 << 20, per_step + (4 << 20))))

    cost = pl.CostEstimate(
        flops=B * l_used * H + B * l_out * H,
        transcendentals=0,
        bytes_accessed=(B * l_used * H + B * l_out * H) * itemsize,
    )

    kernel = functools.partial(_avg_pool_kernel, kernel_size=kernel_size, lc=lc)

    if out_2d:
        grid = (B // bt, H // ht)
        in_specs = [pl.BlockSpec((bt, lw, ht), lambda b, h: (b, 0, h))]
        out_specs = pl.BlockSpec((bt, ht), lambda b, h: (b, h))
        out_shape = jax.ShapeDtypeStruct((B, H), x.dtype)
    else:
        grid = (B // bt, l_out // lc, H // ht)
        in_specs = [pl.BlockSpec((bt, lw, ht), lambda b, l, h: (b, l, h))]
        out_specs = pl.BlockSpec((bt, lc, ht), lambda b, l, h: (b, l, h))
        out_shape = jax.ShapeDtypeStruct((B, l_out, H), x.dtype)

    out = pl.pallas_call(
        kernel,
        out_shape=out_shape,
        grid=grid,
        in_specs=in_specs,
        out_specs=out_specs,
        compiler_params=pltpu.CompilerParams(
            dimension_semantics=("parallel",) * len(grid),
            vmem_limit_bytes=vmem_limit,
        ),
        cost_estimate=cost,
    )(x)
    return out, out_2d


def avg_pool(x, kernel_size, *, force_pallas=False):
    """Equivalent of AvgPool.forward(x, mask=None).  x: (B, L, H) -> (B, H, L_out)
    (squeezed to (B, H) when L_out == 1)."""
    B, L, H = x.shape
    l_out = L // kernel_size  # AvgPool1d default: stride == kernel_size, no padding
    assert l_out >= 1, "kernel_size larger than sequence length"

    tiny = x.size * jnp.dtype(x.dtype).itemsize < (1 << 20)
    if tiny and not force_pallas:
        # A pallas_call over a few KiB is pure launch/per-step overhead; let XLA fuse it.
        pooled = jnp.mean(
            x[:, : l_out * kernel_size, :]
            .reshape(B, l_out, kernel_size, H)
            .astype(jnp.float32),
            axis=2,
        ).astype(x.dtype)
        out = jnp.transpose(pooled, (0, 2, 1))
        return out[..., 0] if l_out == 1 else out

    pooled, out_2d = _avg_pool_pallas(x, kernel_size, l_out)
    if out_2d:
        return pooled  # already (B, H): no post-kernel transpose / extra HBM pass
    out = jnp.transpose(pooled, (0, 2, 1))  # kept in XLA: l_out typically << 128
    return out[..., 0] if l_out == 1 else out


def make_mask_embedding(segment_num):
    """Deterministic init mirroring nn.Embedding(segment_num+1, segment_num) from
    __init__ (frozen weights = [zeros(segment_num); I(segment_num)]).  Unused by the
    forward path implemented here (masked branch is broken in the reference)."""
    w = np.concatenate(
        [np.zeros((1, segment_num)), np.identity(segment_num)], axis=0
    ).astype(np.float32)
    return jnp.asarray(w)


# ------------------------------- test ---------------------------------------


if __name__ == "__main__":
    key = jax.random.PRNGKey(0)

    # Parameter init from __init__ (deterministic, unused in the un-masked path).
    segment_num = 3
    _mask_embedding_weight = make_mask_embedding(segment_num)

    def _ref(x, k):
        B, L, H = x.shape
        lo = L // k
        p = jnp.mean(
            x[:, : lo * k, :].reshape(B, lo, k, H).astype(jnp.float32), axis=2
        ).astype(x.dtype)
        p = jnp.transpose(p, (0, 2, 1))
        return p[..., 0] if lo == 1 else p

    cases = [
        # (shape, kernel_size, dtype)
        ((2, 16, 32), 16, jnp.float32),   # typical: pool whole sequence -> (B, H) fast path
        ((2, 16, 256), 8, jnp.float32),   # l_out=2, sublane-aligned window -> reshape path
        ((2, 12, 128), 4, jnp.float32),   # l_out=3, k%8!=0 -> strided-accumulate path
        ((2, 18, 128), 4, jnp.float32),   # l_out=4 with dropped tail (L % k != 0)
        ((2, 16, 32), 16, jnp.bfloat16),  # low-precision input (itemsize-aware budgets)
    ]
    keys = jax.random.split(key, len(cases))
    for (shape, k, dt), kk in zip(cases, keys):
        x = jax.random.normal(kk, shape, dtype=jnp.float32).astype(dt)
        out = jax.block_until_ready(avg_pool(x, k, force_pallas=True))
        ref = _ref(x, k)
        assert out.shape == ref.shape, (out.shape, ref.shape)
        tol = 1e-6 if dt == jnp.float32 else 2e-2
        np.testing.assert_allclose(
            np.asarray(out.astype(jnp.float32)),
            np.asarray(ref.astype(jnp.float32)),
            rtol=tol, atol=tol,
        )

    # Also exercise the tiny-size XLA-fallback dispatch path once.
    x = jax.random.normal(key, (2, 16, 32), dtype=jnp.float32)
    out = jax.block_until_ready(avg_pool(x, 16))
    np.testing.assert_allclose(np.asarray(out), np.asarray(_ref(x, 16)), rtol=1e-6, atol=1e-6)

    print("KERNEL_OK")
</pallas_src>

<mosaic_0001>
module attributes {stable_mosaic.version = 11 : i64} {
  func.func @_avg_pool_kernel(%arg0: i32, %arg1: i32, %arg2: memref<2x16x32xf32, #tpu.memory_space<vmem>>, %arg3: memref<2x32xf32, #tpu.memory_space<vmem>>) attributes {dimension_semantics = [#tpu.dimension_semantics<parallel>, #tpu.dimension_semantics<parallel>], iteration_bounds = array<i64: 1, 1>, scalar_prefetch = 0 : i64, scratch_operands = 0 : i64, tpu.core_type = #tpu.core_type<tc>, window_params = [{transform_indices = @transform_0, window_bounds = array<i64: 2, 16, 32>}, {transform_indices = @transform_1, window_bounds = array<i64: 2, 32>}]} {
    %c0 = arith.constant 0 : index
    %c0_0 = arith.constant 0 : index
    %c0_1 = arith.constant 0 : index
    %0 = vector.load %arg2[%c0, %c0_0, %c0_1] : memref<2x16x32xf32, #tpu.memory_space<vmem>>, vector<2x16x32xf32>
    %1 = vector.shape_cast %0 : vector<2x16x32xf32> to vector<2x1x16x32xf32>
    %cst = arith.constant dense<0.000000e+00> : vector<2x1x32xf32>
    %2 = vector.multi_reduction <add>, %1, %cst [2] : vector<2x1x16x32xf32> to vector<2x1x32xf32>
    %cst_2 = arith.constant 6.250000e-02 : f32
    %3 = vector.broadcast %cst_2 : f32 to vector<2x1x32xf32>
    %4 = arith.mulf %2, %3 : vector<2x1x32xf32>
    %5 = vector.shape_cast %4 : vector<2x1x32xf32> to vector<2x32xf32>
    %c0_3 = arith.constant 0 : index
    %c0_4 = arith.constant 0 : index
    %6 = vector.load %arg3[%c0_3, %c0_4] : memref<2x32xf32, #tpu.memory_space<vmem>>, vector<2x32xf32>
    tpu.vector_store %arg3[%c0_3, %c0_4], %5 {strides = array<i32>} : memref<2x32xf32, #tpu.memory_space<vmem>>, vector<2x32xf32>,
    return
  }
  func.func @transform_0(%arg0: i32, %arg1: i32) -> (i32, i32, i32) {
    %c0_i32 = arith.constant 0 : i32
    %c0_i32_0 = arith.constant 0 : i32
    return %arg0, %c0_i32, %arg1 : i32, i32, i32
  }
  func.func @transform_1(%arg0: i32, %arg1: i32) -> (i32, i32) {
    %c0_i32 = arith.constant 0 : i32
    return %arg0, %arg1 : i32, i32
  }
}

</mosaic_0001>

<llo_original>
// kernel: tpu_custom_call.1
$region0: #{tpu_custom_call.1}
  #allocation0 [shape = 'u32[]', space=smem, size = 0x4, offset = 0x4, fixed_abs, tag = 'smem constant byte address 0x4 - core index']
  #allocation1 [shape = 'u32[144,128]{1,0:T(1,128)}', space=vmem, size = 0x12000, scoped, tag = 'internal scratch']
  %s0 = inlined_call_operand.hbm [shape: f32[2,16,32], index: 0, kind: input, shape index: {}]
  %s1 = inlined_call_operand.hbm [shape: f32[2,32], index: 1, kind: output, shape index: {}]
  %s2 = sld [smem:[#allocation0]]
  $region18: #{tpu_custom_call.1} parent=0
    _
  %s4 = ssub.s32 1, %s2
  %s5 = scalar_select 0, %s4, %s2
  $region1: #{tpu_custom_call.1} parent=0
    #allocation2 [shape = 'u8[16384]{0}', space=vmem, size = 0x4000, scoped, tag = 'input window, operand 0, single buffered']
    #allocation3 [shape = 's32[1]{0}', space=sflag, size = 0x4, scoped, tag = 'scoped memory for tpu_custom_call.1']
    #allocation4 [shape = 's32[1]{0}', space=sflag, size = 0x4, scoped, tag = 'scoped memory for tpu_custom_call.1']
    #allocation5 [shape = 'u8[1024]{0}', space=vmem, size = 0x400, scoped, tag = 'output window, operand 0, single buffered']
    %6 = vsyncpa [#allocation3], 0
    %7 = vsyncpa [#allocation4], 0
    // Predicated region
    $region2: #{tpu_custom_call.1} parent=1 // pred_check
      _
    $region3: #{tpu_custom_call.1} parent=1 // pred_check_branch
      %9 = sbr.rel (0) target = $region5
    $region4: #{tpu_custom_call.1} parent=1 // pred_region
      %s11 = ssub.s32 512, 512
      %12 = vsyncadd [#allocation3], %s11
      %s13 = sshll.u32 [#allocation2], 4
      %s14 = int_to_ptr.vmem [resolvable:$true] %s13
      %19 = dma.hbm_to_vmem [thread:$0]  %s0, 512, %s14, [#allocation3], 128, 128, 8
    $region5: #{tpu_custom_call.1} parent=1 // pred_fallthru
      _
    // Predicated region
    $region6: #{tpu_custom_call.1} parent=1 // pred_check
      _
    $region7: #{tpu_custom_call.1} parent=1 // pred_check_branch
      %21 = sbr.rel (0) target = $region9
    $region8: #{tpu_custom_call.1} parent=1 // pred_region
      %22 = dma.done [#allocation3], 512
    $region9: #{tpu_custom_call.1} parent=1 // pred_fallthru
      _
    %v23 = vld [vmem:[#allocation2] sm:$0xff]
    %v24 = vld [vmem:[#allocation2 + $0x8] sm:$0xff]
    %v25 = vld [vmem:[#allocation2 + $0x10] sm:$0xff]
    %v26 = vld [vmem:[#allocation2 + $0x18] sm:$0xff]
    %vm27 = vcmask 261120
    %v28 = vsel %vm27, %v23, 0.0
    %v29 = vsel %vm27, %v24, 0.0
    %v30 = vadd.f32 %v28, %v29
    %v31 = vrot.slane %v30, 4
    %v32 = vadd.f32 %v30, %v31
    %v33 = vrot.slane %v32, 2
    %v34 = vadd.f32 %v32, %v33
    %v35 = vrot.slane %v34, 1
    %v36 = vadd.f32 %v34, %v35
    %v37 = vsel %vm27, %v25, 0.0
    %v38 = vsel %vm27, %v26, 0.0
    %v39 = vadd.f32 %v37, %v38
    %v40 = vrot.slane %v39, 4
    %v41 = vadd.f32 %v39, %v40
    %v42 = vrot.slane %v41, 2
    %v43 = vadd.f32 %v41, %v42
    %v44 = vrot.slane %v43, 1
    %v45 = vadd.f32 %v43, %v44
    %v46 = vmul.f32 %v36, 0.0625
    %v47 = vmul.f32 %v45, 0.0625
    %vm50 = vcmask 1041409
    %v51 = vsel %vm50, %v47, %v46
    %vm53 = vcmask 254976
    %54 = vst.msk [vmem:[#allocation5] sm:$0x3] %vm53, %v51
    // Predicated region
    $region10: #{tpu_custom_call.1} parent=1 // pred_check
      _
    $region11: #{tpu_custom_call.1} parent=1 // pred_check_branch
      %56 = sbr.rel (0) target = $region13
    $region12: #{tpu_custom_call.1} parent=1 // pred_region
      %s58 = ssub.s32 32, 32
      %59 = vsyncadd [#allocation4], %s58
      %s61 = sshll.u32 [#allocation5], 4
      %s62 = int_to_ptr.vmem [resolvable:$true] %s61
      %64 = dma.vmem_to_hbm [thread:$0]  %s62, 32, %s1, [#allocation4]
    $region13: #{tpu_custom_call.1} parent=1 // pred_fallthru
      _
    // Predicated region
    $region14: #{tpu_custom_call.1} parent=1 // pred_check
      _
    $region15: #{tpu_custom_call.1} parent=1 // pred_check_branch
      %66 = sbr.rel (0) target = $region17
    $region16: #{tpu_custom_call.1} parent=1 // pred_region
      %67 = dma.done [#allocation4], 32
    $region17: #{tpu_custom_call.1} parent=1 // pred_fallthru
      _
    %68 = vsyncpa [#allocation3], 1
    %69 = vsyncpa [#allocation4], 1

</llo_original>
